<compile_context>
chip_gen: v7x
topology: tpu7x:2x2x1
jax: 0.10.0
libtpu: 0.0.40
codegen_flags: <defaults>
</compile_context>

<pallas_src>
import jax
import jax.numpy as jnp
from jax import lax
from jax.experimental import pallas as pl
from jax.experimental.pallas import tpu as pltpu

LANES = 128
SUBLANES = 8
STRIP_GRAN = 256           # rows per inner strip (256*128*4B = 128 KiB f32)
MAX_BLOCK_ROWS = 8192      # hard cap: 4 MiB per f32 input block
EPS = 1e-8


def _vmem_capacity_bytes() -> int:
    try:
        info = pltpu.get_tpu_info()
        return int(getattr(info, "vmem_capacity_bytes", 64 << 20))
    except Exception:
        return 64 << 20    # conservative fallback (v7x per-TC VMEM)


def _make_loss_kernel(pen, rows_valid, block_rows, strip_rows,
                      blocks_per_core, use_weight, need_mask):
    n_strips = block_rows // strip_rows

    def kernel(*refs):
        if use_weight:
            y_ref, t_ref, w_ref, o_ref = refs
        else:
            y_ref, t_ref, o_ref = refs
            w_ref = None

        i = pl.program_id(0)
        j = pl.program_id(1)

        # Output block is this core's accumulator (same block index across the
        # reduction axis j) -> init once per sweep.
        @pl.when(j == 0)
        def _():
            o_ref[...] = jnp.zeros_like(o_ref)

        # Logical (unclamped) block id -> global row offset. The index_map
        # clamps the DMA source for duplicated blocks; masking below uses the
        # LOGICAL offset so duplicated / partial blocks contribute exactly 0.
        row0 = (i * blocks_per_core + j) * block_rows

        def strip_body(s, acc):
            r = pl.multiple_of(s * strip_rows, strip_rows)
            y = y_ref[pl.ds(r, strip_rows), :].astype(jnp.float32)
            t = t_ref[pl.ds(r, strip_rows), :].astype(jnp.float32)
            w = (w_ref[pl.ds(r, strip_rows), :].astype(jnp.float32)
                 if use_weight else None)
            if need_mask:
                grow = (row0 + r
                        + lax.broadcasted_iota(jnp.int32, (strip_rows, LANES), 0))
                m = grow < rows_valid
                zero = jnp.float32(0.0)
                # Zero y/t (and w) BEFORE the logs: log(garbage + eps) may be
                # NaN and NaN*0 would poison the accumulator.
                y = jnp.where(m, y, zero)
                t = jnp.where(m, t, zero)
                if use_weight:
                    w = jnp.where(m, w, zero)
            diff = jnp.abs(t - y)
            c = -diff * (t * jnp.log(y + EPS)
                         + jnp.float32(pen) * (1.0 - t) * jnp.log(1.0 - y + EPS))
            if use_weight:
                c = c * w
            # Fold the strip to one (8, 128) vreg of partial sums: the reshape
            # is (8,128)-tile aligned, the axis-0 sum is pure VPU adds.
            return acc + c.reshape(-1, SUBLANES, LANES).sum(axis=0)

        acc = lax.fori_loop(0, n_strips, strip_body,
                            jnp.zeros((SUBLANES, LANES), jnp.float32))
        o_ref[...] += acc

    return kernel


def _jnp_loss(y, t, w_full, pen):
    y = y.astype(jnp.float32)
    t = t.astype(jnp.float32)
    diff = jnp.abs(t - y)
    c = -diff * (t * jnp.log(y + EPS)
                 + jnp.float32(pen) * (1.0 - t) * jnp.log(1.0 - y + EPS))
    if w_full is not None:
        c = c * w_full.astype(jnp.float32)
    return jnp.sum(c)


def impractical_loss(y, t, weight=None, pen: float = 0.1, *,
                     min_kernel_elems: int = 128 * 1024):
    """Pallas TPU version of Impractical_Loss.forward. Returns a scalar f32."""
    assert y.shape == t.shape
    n = int(y.size)

    scalar_weight = None
    w_full = None
    if weight is not None:
        w = jnp.asarray(weight)
        if int(w.size) == 1:
            # sum(w*c) == w*sum(c): fold after the reduction, no HBM stream.
            scalar_weight = w.reshape(()).astype(jnp.float32)
        else:
            # TODO(synk): broadcastable (e.g. per-channel) weights are
            # materialized and streamed as a 3rd HBM stream; an SMEM-resident
            # per-channel path would drop this back to 2 streams.
            w_full = jnp.broadcast_to(w, y.shape)

    # Small-input fast path: one fused XLA pass beats kernel-launch + grid
    # overhead, and sub-(8,128) inputs can't fill a single vreg tile anyway.
    if n < max(int(min_kernel_elems), SUBLANES * LANES):
        res = _jnp_loss(y, t, w_full, pen)
        return res * scalar_weight if scalar_weight is not None else res

    def _slab(x):
        # Row-major flatten -> lane-dense (rows, 128) slab in NATIVE dtype.
        # When n % 128 == 0 (common for CNN tensors) this is a zero-copy
        # reshape: no wrapper-side HBM pass.
        x = jnp.ravel(x)
        if n % LANES != 0:
            # Rare path (one HBM copy): zero padding contributes exactly 0.
            x = jnp.pad(x, (0, LANES - n % LANES))
        return x.reshape(-1, LANES)

    args = [_slab(y), _slab(t)]
    if w_full is not None:
        args.append(_slab(w_full))
    rows = args[0].shape[0]
    num_streams = len(args)

    # ---- generation-aware block sizing -------------------------------------
    vmem_cap = _vmem_capacity_bytes()
    budget = vmem_cap // 3                         # double-buffered input blocks
    max_item = max(a.dtype.itemsize for a in args)
    max_rows = budget // (num_streams * 2 * LANES * max_item)
    max_rows = max(SUBLANES, min(MAX_BLOCK_ROWS, int(max_rows)))
    if rows >= STRIP_GRAN and max_rows >= STRIP_GRAN:
        block_rows = min((max_rows // STRIP_GRAN) * STRIP_GRAN,
                         (rows // STRIP_GRAN) * STRIP_GRAN)
        strip_rows = STRIP_GRAN
    else:
        block_rows = min((max_rows // SUBLANES) * SUBLANES,
                         (rows // SUBLANES) * SUBLANES)
        strip_rows = block_rows

    n_blocks = -(-rows // block_rows)
    par = 2 if n_blocks >= 2 else 1                # both TensorCores on v7x
    blocks_per_core = -(-n_blocks // par)
    need_mask = (par * blocks_per_core * block_rows) != rows

    def in_map(i, j, _bpc=blocks_per_core, _nb=n_blocks):
        # Clamp so a duplicated (odd block count) iteration never DMAs fully
        # out of bounds; the kernel masks its contribution to zero.
        return (jnp.minimum(i * _bpc + j, _nb - 1), 0)

    in_specs = [pl.BlockSpec((block_rows, LANES), in_map) for _ in args]

    total_block_bytes = sum(2 * block_rows * LANES * a.dtype.itemsize
                            for a in args)
    vmem_limit = max(total_block_bytes + (8 << 20), 16 << 20)
    vmem_limit = min(vmem_limit, (vmem_cap * 3) // 4)

    flops = (11 if w_full is not None else 10) * n
    cost = pl.CostEstimate(
        flops=flops, transcendentals=2 * n,
        bytes_accessed=sum(int(a.nbytes) for a in args)
        + par * SUBLANES * LANES * 4)

    out = pl.pallas_call(
        _make_loss_kernel(float(pen), rows, block_rows, strip_rows,
                          blocks_per_core, w_full is not None, need_mask),
        out_shape=jax.ShapeDtypeStruct((par * SUBLANES, LANES), jnp.float32),
        grid_spec=pltpu.PrefetchScalarGridSpec(
            num_scalar_prefetch=0,
            grid=(par, blocks_per_core),
            in_specs=in_specs,
            out_specs=pl.BlockSpec((SUBLANES, LANES), lambda i, j: (i, 0)),
        ),
        compiler_params=pltpu.CompilerParams(
            dimension_semantics=("parallel", "arbitrary"),
            vmem_limit_bytes=int(vmem_limit)),
        cost_estimate=cost,
    )(*args)

    # Single final cross-lane/sublane reduce (tiny: par * 8 * 128 f32).
    result = jnp.sum(out)
    if scalar_weight is not None:
        result = result * scalar_weight
    return result


def _reference(y, t, weight=None, pen: float = 0.1):
    y = y.astype(jnp.float32)
    t = t.astype(jnp.float32)
    diff = jnp.abs(t - y)
    c = -diff * (t * jnp.log(y + EPS) + pen * (1.0 - t) * jnp.log(1.0 - y + EPS))
    if weight is not None:
        c = c * jnp.asarray(weight).astype(jnp.float32)
    return jnp.sum(c)


if __name__ == "__main__":
    key = jax.random.PRNGKey(0)
    k1, k2, k3, k4, k5 = jax.random.split(key, 5)

    # 1) Base NCHW case (n % 128 == 0) — force the Pallas kernel path.
    shape = (2, 4, 16, 16)
    y = jax.random.uniform(k1, shape, jnp.float32, minval=0.01, maxval=0.99)
    t = jax.random.uniform(k2, shape, jnp.float32, minval=0.0, maxval=1.0)
    out = jax.block_until_ready(impractical_loss(y, t, pen=0.1, min_kernel_elems=0))
    ref = _reference(y, t, pen=0.1)
    assert jnp.allclose(out, ref, rtol=1e-4, atol=1e-4), (out, ref)

    # Scalar weight (folded after the reduction, no extra HBM stream).
    out_w = jax.block_until_ready(
        impractical_loss(y, t, weight=jnp.float32(0.5), pen=0.1, min_kernel_elems=0))
    ref_w = _reference(y, t, weight=jnp.float32(0.5), pen=0.1)
    assert jnp.allclose(out_w, ref_w, rtol=1e-4, atol=1e-4), (out_w, ref_w)

    # Default config on a tiny tensor exercises the small-input fast path.
    out_fp = jax.block_until_ready(impractical_loss(y, t, pen=0.1))
    assert jnp.allclose(out_fp, ref, rtol=1e-4, atol=1e-4), (out_fp, ref)

    # 2) rows not a multiple of block_rows -> partial-block masking + par=2,
    #    plus a broadcastable (per-channel) streamed weight.
    shape2 = (2, 5, 16, 16)
    y2 = jax.random.uniform(k3, shape2, jnp.float32, minval=0.01, maxval=0.99)
    t2 = jax.random.uniform(k4, shape2, jnp.float32, minval=0.0, maxval=1.0)
    w2 = jnp.linspace(0.5, 1.5, shape2[1], dtype=jnp.float32).reshape(1, -1, 1, 1)
    out2 = jax.block_until_ready(
        impractical_loss(y2, t2, weight=w2, pen=0.25, min_kernel_elems=0))
    ref2 = _reference(y2, t2, weight=w2, pen=0.25)
    assert jnp.allclose(out2, ref2, rtol=1e-4, atol=1e-4), (out2, ref2)

    # 3) n not a multiple of 128 -> rare zero-pad path (still exact).
    shape3 = (2, 3, 17, 19)
    y3 = jax.random.uniform(k5, shape3, jnp.float32, minval=0.01, maxval=0.99)
    t3 = jax.random.uniform(k1, shape3, jnp.float32, minval=0.0, maxval=1.0)
    out3 = jax.block_until_ready(impractical_loss(y3, t3, pen=0.1, min_kernel_elems=0))
    ref3 = _reference(y3, t3, pen=0.1)
    assert jnp.allclose(out3, ref3, rtol=1e-4, atol=1e-4), (out3, ref3)

    print("KERNEL_OK")
</pallas_src>

<mosaic_0001>
module attributes {stable_mosaic.version = 11 : i64} {
  func.func @kernel(%arg0: i32, %arg1: i32, %arg2: memref<16x128xf32, #tpu.memory_space<vmem>>, %arg3: memref<16x128xf32, #tpu.memory_space<vmem>>, %arg4: memref<8x128xf32, #tpu.memory_space<vmem>>) attributes {dimension_semantics = [#tpu.dimension_semantics<parallel>, #tpu.dimension_semantics<arbitrary>], iteration_bounds = array<i64: 1, 1>, scalar_prefetch = 0 : i64, scratch_operands = 0 : i64, tpu.core_type = #tpu.core_type<tc>, window_params = [{transform_indices = @transform_0, window_bounds = array<i64: 16, 128>}, {transform_indices = @transform_1, window_bounds = array<i64: 16, 128>}, {transform_indices = @transform_2, window_bounds = array<i64: 8, 128>}]} {
    %c0_i32 = arith.constant 0 : i32
    %0 = arith.cmpi eq, %arg1, %c0_i32 : i32
    %1 = arith.extui %0 : i1 to i32
    %c0_i32_0 = arith.constant 0 : i32
    %2 = arith.cmpi ne, %1, %c0_i32_0 : i32
    scf.if %2 {
      %cst_14 = arith.constant 0.000000e+00 : f32
      %36 = vector.broadcast %cst_14 : f32 to vector<8x128xf32>
      %c0_15 = arith.constant 0 : index
      %c0_16 = arith.constant 0 : index
      %37 = vector.load %arg4[%c0_15, %c0_16] : memref<8x128xf32, #tpu.memory_space<vmem>>, vector<8x128xf32>
      tpu.vector_store %arg4[%c0_15, %c0_16], %36 {strides = array<i32>} : memref<8x128xf32, #tpu.memory_space<vmem>>, vector<8x128xf32>,
    } else {
    }
    %cst = arith.constant 0.000000e+00 : f32
    %3 = vector.broadcast %cst : f32 to vector<8x128xf32>
    %c0_i32_1 = arith.constant 0 : i32
    %c16_i32 = arith.constant 16 : i32
    %4 = arith.muli %c0_i32_1, %c16_i32 : i32
    %5 = tpu.assume_multiple %4, 16 : i32
    %6 = arith.index_cast %5 : i32 to index
    %c0 = arith.constant 0 : index
    %7 = vector.load %arg2[%6, %c0] : memref<16x128xf32, #tpu.memory_space<vmem>>, vector<16x128xf32>
    %8 = arith.index_cast %5 : i32 to index
    %c0_2 = arith.constant 0 : index
    %9 = vector.load %arg3[%8, %c0_2] : memref<16x128xf32, #tpu.memory_space<vmem>>, vector<16x128xf32>
    %10 = arith.subf %9, %7 : vector<16x128xf32>
    %11 = math.absf %10 : vector<16x128xf32>
    %cst_3 = arith.constant 0.000000e+00 : f32
    %12 = vector.broadcast %cst_3 : f32 to vector<16x128xf32>
    %13 = arith.subf %12, %11 : vector<16x128xf32>
    %cst_4 = arith.constant 9.99999993E-9 : f32
    %14 = vector.broadcast %cst_4 : f32 to vector<16x128xf32>
    %15 = arith.addf %7, %14 : vector<16x128xf32>
    %16 = math.log %15 : vector<16x128xf32>
    %17 = arith.mulf %9, %16 : vector<16x128xf32>
    %cst_5 = arith.constant 1.000000e+00 : f32
    %18 = vector.broadcast %cst_5 : f32 to vector<16x128xf32>
    %19 = arith.subf %18, %9 : vector<16x128xf32>
    %cst_6 = arith.constant 1.000000e-01 : f32
    %20 = vector.broadcast %cst_6 : f32 to vector<16x128xf32>
    %21 = arith.mulf %20, %19 : vector<16x128xf32>
    %cst_7 = arith.constant 1.000000e+00 : f32
    %22 = vector.broadcast %cst_7 : f32 to vector<16x128xf32>
    %23 = arith.subf %22, %7 : vector<16x128xf32>
    %cst_8 = arith.constant 9.99999993E-9 : f32
    %24 = vector.broadcast %cst_8 : f32 to vector<16x128xf32>
    %25 = arith.addf %23, %24 : vector<16x128xf32>
    %26 = math.log %25 : vector<16x128xf32>
    %27 = arith.mulf %21, %26 : vector<16x128xf32>
    %28 = arith.addf %17, %27 : vector<16x128xf32>
    %29 = arith.mulf %13, %28 : vector<16x128xf32>
    %30 = vector.shape_cast %29 : vector<16x128xf32> to vector<2x8x128xf32>
    %cst_9 = arith.constant dense<0.000000e+00> : vector<8x128xf32>
    %31 = vector.multi_reduction <add>, %30, %cst_9 [0] : vector<2x8x128xf32> to vector<8x128xf32>
    %32 = arith.addf %3, %31 : vector<8x128xf32>
    %c1_i32 = arith.constant 1 : i32
    %c0_10 = arith.constant 0 : index
    %c0_11 = arith.constant 0 : index
    %33 = vector.load %arg4[%c0_10, %c0_11] : memref<8x128xf32, #tpu.memory_space<vmem>>, vector<8x128xf32>
    %34 = arith.addf %33, %32 : vector<8x128xf32>
    %c0_12 = arith.constant 0 : index
    %c0_13 = arith.constant 0 : index
    %35 = vector.load %arg4[%c0_12, %c0_13] : memref<8x128xf32, #tpu.memory_space<vmem>>, vector<8x128xf32>
    tpu.vector_store %arg4[%c0_12, %c0_13], %34 {strides = array<i32>} : memref<8x128xf32, #tpu.memory_space<vmem>>, vector<8x128xf32>,
    return
  }
  func.func @transform_0(%arg0: i32, %arg1: i32) -> (i32, i32) {
    %c1_i32 = arith.constant 1 : i32
    %0 = arith.muli %arg0, %c1_i32 : i32
    %1 = arith.addi %0, %arg1 : i32
    %c0_i32 = arith.constant 0 : i32
    %2 = arith.minsi %1, %c0_i32 : i32
    %c0_i32_0 = arith.constant 0 : i32
    %c0_i32_1 = arith.constant 0 : i32
    return %2, %c0_i32_0 : i32, i32
  }
  func.func @transform_1(%arg0: i32, %arg1: i32) -> (i32, i32) {
    %c1_i32 = arith.constant 1 : i32
    %0 = arith.muli %arg0, %c1_i32 : i32
    %1 = arith.addi %0, %arg1 : i32
    %c0_i32 = arith.constant 0 : i32
    %2 = arith.minsi %1, %c0_i32 : i32
    %c0_i32_0 = arith.constant 0 : i32
    %c0_i32_1 = arith.constant 0 : i32
    return %2, %c0_i32_0 : i32, i32
  }
  func.func @transform_2(%arg0: i32, %arg1: i32) -> (i32, i32) {
    %c0_i32 = arith.constant 0 : i32
    %c0_i32_0 = arith.constant 0 : i32
    return %arg0, %c0_i32 : i32, i32
  }
}

</mosaic_0001>

<llo_original>
// kernel: tpu_custom_call.1
$region0: #{tpu_custom_call.1}
  #allocation0 [shape = 'u32[]', space=smem, size = 0x4, offset = 0x4, fixed_abs, tag = 'smem constant byte address 0x4 - core index']
  #allocation1 [shape = 'u32[144,128]{1,0:T(1,128)}', space=vmem, size = 0x12000, scoped, tag = 'internal scratch']
  %s0 = inlined_call_operand.hbm [shape: f32[16,128], index: 0, kind: input, shape index: {}]
  %s1 = inlined_call_operand.hbm [shape: f32[16,128], index: 1, kind: input, shape index: {}]
  %s2 = inlined_call_operand.hbm [shape: f32[8,128], index: 2, kind: output, shape index: {}]
  %s3 = sld [smem:[#allocation0]]
  $region30: #{tpu_custom_call.1} parent=0
    _
  %s5 = ssub.s32 1, %s3
  %s6 = scalar_select 0, %s5, %s3
  $region1: #{tpu_custom_call.1} parent=0
    #allocation2 [shape = 'u8[8192]{0}', space=vmem, size = 0x2000, scoped, tag = 'input window, operand 0, single buffered']
    #allocation3 [shape = 's32[1]{0}', space=sflag, size = 0x4, scoped, tag = 'scoped memory for tpu_custom_call.1']
    #allocation4 [shape = 's32[1]{0}', space=sflag, size = 0x4, scoped, tag = 'scoped memory for tpu_custom_call.1']
    #allocation5 [shape = 'u8[8192]{0}', space=vmem, size = 0x2000, scoped, tag = 'input window, operand 1, single buffered']
    #allocation6 [shape = 's32[1]{0}', space=sflag, size = 0x4, scoped, tag = 'scoped memory for tpu_custom_call.1']
    #allocation7 [shape = 'u8[4096]{0}', space=vmem, size = 0x1000, scoped, tag = 'output window, operand 0, single buffered']
    %7 = vsyncpa [#allocation3], 0
    %8 = vsyncpa [#allocation6], 0
    %9 = vsyncpa [#allocation4], 0
    // Predicated region
    $region2: #{tpu_custom_call.1} parent=1 // pred_check
      _
    $region3: #{tpu_custom_call.1} parent=1 // pred_check_branch
      %11 = sbr.rel (0) target = $region5
    $region4: #{tpu_custom_call.1} parent=1 // pred_region
      %s12 = sadd.s32 0, 0
      %p13 = scmp.lt.s32.totalorder %s12, 0
      %s14 = scalar_select %p13, %s12, 0
      %s15 = smul.u32 2, %s14
      %s17 = ssub.s32 256, 256
      %18 = vsyncadd [#allocation3], %s17
      %s19 = smul.addr %s15, 128
      %s20 = scalar_lea.hbm %s0, %s19
      %s21 = sshll.u32 [#allocation2], 4
      %s22 = int_to_ptr.vmem [resolvable:$true] %s21
      %27 = dma.hbm_to_vmem [thread:$0]  %s20, 256, %s22, [#allocation3], 128, 128, 8
    $region5: #{tpu_custom_call.1} parent=1 // pred_fallthru
      _
    // Predicated region
    $region6: #{tpu_custom_call.1} parent=1 // pred_check
      _
    $region7: #{tpu_custom_call.1} parent=1 // pred_check_branch
      %29 = sbr.rel (0) target = $region9
    $region8: #{tpu_custom_call.1} parent=1 // pred_region
      %s30 = sadd.s32 0, 0
      %p31 = scmp.lt.s32.totalorder %s30, 0
      %s32 = scalar_select %p31, %s30, 0
      %s33 = smul.u32 2, %s32
      %s35 = ssub.s32 256, 256
      %36 = vsyncadd [#allocation6], %s35
      %s37 = smul.addr %s33, 128
      %s38 = scalar_lea.hbm %s1, %s37
      %s39 = sshll.u32 [#allocation5], 4
      %s40 = int_to_ptr.vmem [resolvable:$true] %s39
      %45 = dma.hbm_to_vmem [thread:$0]  %s38, 256, %s40, [#allocation6], 128, 128, 8
    $region9: #{tpu_custom_call.1} parent=1 // pred_fallthru
      _
    // Predicated region
    $region10: #{tpu_custom_call.1} parent=1 // pred_check
      _
    $region11: #{tpu_custom_call.1} parent=1 // pred_check_branch
      %47 = sbr.rel (0) target = $region13
    $region12: #{tpu_custom_call.1} parent=1 // pred_region
      %48 = dma.done [#allocation3], 256
    $region13: #{tpu_custom_call.1} parent=1 // pred_fallthru
      _
    // Predicated region
    $region14: #{tpu_custom_call.1} parent=1 // pred_check
      _
    $region15: #{tpu_custom_call.1} parent=1 // pred_check_branch
      %50 = sbr.rel (0) target = $region17
    $region16: #{tpu_custom_call.1} parent=1 // pred_region
      %51 = dma.done [#allocation6], 256
    $region17: #{tpu_custom_call.1} parent=1 // pred_fallthru
      _
    %s52 = sadd.s32 0, 0
    %p53 = scmp.lt.s32.totalorder %s52, 0
    %s54 = scalar_select %p53, %s52, 0
    %s55 = smul.u32 2, %s54
    %s56 = sadd.s32 0, 0
    %p57 = scmp.lt.s32.totalorder %s56, 0
    %s58 = scalar_select %p57, %s56, 0
    %s59 = smul.u32 2, %s58
    %p60 = scmp.eq.s32.totalorder 0, 0
    // Predicated region
    $region18: #{tpu_custom_call.1} parent=1 // pred_check
      %p61 = pneg %p60
    $region19: #{tpu_custom_call.1} parent=1 // pred_check_branch
      %63 = sbr.rel (%p61) target = $region21
    $region20: #{tpu_custom_call.1} parent=1 // pred_region
      %64 = vst [vmem:[#allocation7] sm:$0xff] 0.0
    $region21: #{tpu_custom_call.1} parent=1 // pred_fallthru
      _
    %v65 = vld [vmem:[#allocation2] sm:$0xff]
    %v66 = vld [vmem:[#allocation2 + $0x8] sm:$0xff]
    %v67 = vld [vmem:[#allocation5] sm:$0xff]
    %v68 = vld [vmem:[#allocation5 + $0x8] sm:$0xff]
    %v69 = vsub.f32 %v67, %v65
    %v70 = vsub.f32 %v68, %v66
    %v71 = vand.u32 2147483647, %v69
    %v72 = vand.u32 2147483647, %v70
    %v73 = vsub.f32 0.0, %v71
    %v74 = vsub.f32 0.0, %v72
    %v75 = vadd.f32 %v65, 1e-08
    %v76 = vadd.f32 %v66, 1e-08
    %v77 = vlog2.pop %v75
    %v78 = vmul.f32 %v77, 0.6931472
    %v79 = vlog2.pop %v76
    %v80 = vmul.f32 %v79, 0.6931472
    %v81 = vmul.f32 %v67, %v78
    %v82 = vmul.f32 %v68, %v80
    %v83 = vsub.f32 1.0, %v67
    %v84 = vsub.f32 1.0, %v68
    %v85 = vmul.f32 %v83, 0.1
    %v86 = vmul.f32 %v84, 0.1
    %v87 = vsub.f32 1.0, %v65
    %v88 = vsub.f32 1.0, %v66
    %v89 = vadd.f32 %v87, 1e-08
    %v90 = vadd.f32 %v88, 1e-08
    %v91 = vlog2.pop %v89
    %v92 = vmul.f32 %v91, 0.6931472
    %v93 = vlog2.pop %v90
    %v94 = vmul.f32 %v93, 0.6931472
    %v95 = vmul.f32 %v85, %v92
    %v96 = vmul.f32 %v86, %v94
    %v97 = vadd.f32 %v81, %v95
    %v98 = vadd.f32 %v82, %v96
    %v99 = vmul.f32 %v73, %v97
    %v100 = vmul.f32 %v74, %v98
    %v101 = vadd.f32 %v99, %v100
    %v102 = vadd.f32 %v101, 0.0
    %v103 = vld [vmem:[#allocation7] sm:$0xff]
    %v104 = vadd.f32 %v103, %v102
    %105 = vst [vmem:[#allocation7] sm:$0xff] %v104
    // Predicated region
    $region22: #{tpu_custom_call.1} parent=1 // pred_check
      _
    $region23: #{tpu_custom_call.1} parent=1 // pred_check_branch
      %107 = sbr.rel (0) target = $region25
    $region24: #{tpu_custom_call.1} parent=1 // pred_region
      %s109 = ssub.s32 128, 128
      %110 = vsyncadd [#allocation4], %s109
      %s112 = sshll.u32 [#allocation7], 4
      %s113 = int_to_ptr.vmem [resolvable:$true] %s112
      %115 = dma.vmem_to_hbm [thread:$0]  %s113, 128, %s2, [#allocation4]
    $region25: #{tpu_custom_call.1} parent=1 // pred_fallthru
      _
    // Predicated region
    $region26: #{tpu_custom_call.1} parent=1 // pred_check
      _
    $region27: #{tpu_custom_call.1} parent=1 // pred_check_branch
      %117 = sbr.rel (0) target = $region29
    $region28: #{tpu_custom_call.1} parent=1 // pred_region
      %118 = dma.done [#allocation4], 128
    $region29: #{tpu_custom_call.1} parent=1 // pred_fallthru
      _
    %119 = vsyncpa [#allocation3], 1
    %120 = vsyncpa [#allocation6], 1
    %121 = vsyncpa [#allocation4], 1

</llo_original>
